<compile_context>
chip_gen: v7x
topology: tpu7x:2x2x1
jax: 0.10.0
libtpu: 0.0.40
codegen_flags: <defaults>
</compile_context>

<pallas_src>
import functools

import jax
import jax.numpy as jnp
from jax import lax
from jax.experimental import pallas as pl
from jax.experimental.pallas import tpu as pltpu


VMEM_BUDGET_BYTES = 48 * 1024 * 1024   # fits v5e/v6e (128 MiB) and v7x (64 MiB)


def _round_up(x, m):
    return ((x + m - 1) // m) * m


def _pick_tile(total, target, align):
    """Largest multiple of `align` <= target that divides `total`, else `total`."""
    if total <= target:
        return total
    t = (target // align) * align
    while t >= align:
        if total % t == 0:
            return t
        t -= align
    return total


# ----------------------------------------------------------------------------
# Fused / tiled linear:  y_i = (x @ w)[:, off_i:off_i+w_i] + b_i
# ----------------------------------------------------------------------------
def _fused_linear_kernel(x_ref, w_ref, b_ref, *o_refs, out_widths):
    # x: (TM, Din), w: (Din, Dout_total), b: (1, Dout_total)
    x = x_ref[...]
    w = w_ref[...]
    if x.dtype != w.dtype:
        x = x.astype(w.dtype)               # bf16 compute path: cast at MXU input
    acc = jnp.dot(x, w, preferred_element_type=jnp.float32)
    acc = acc + b_ref[...].astype(jnp.float32)
    off = 0
    for o_ref, wd in zip(o_refs, out_widths):
        o_ref[...] = acc[:, off:off + wd].astype(o_ref.dtype)
        off += wd


def pallas_fused_linear(x, w, b, out_widths, *, vmem_budget_bytes=VMEM_BUDGET_BYTES):
    """x:(M,Din) @ w:(Din,Dout_total) + b, split along Dout into len(out_widths) outputs."""
    M, Din = x.shape
    Dout = w.shape[1]
    assert sum(out_widths) == Dout

    x_it = jnp.dtype(x.dtype).itemsize
    w_it = jnp.dtype(w.dtype).itemsize
    align = 16 if min(x_it, w_it) < 4 else 8          # bf16 packs 2 rows / sublane

    # Resident weight + bias (assume pipeline double-buffers them: conservative),
    # plus per-row cost of double-buffered x / out tiles and the f32 accumulator.
    resident = 2 * (Din * Dout + Dout) * w_it
    row_bytes = 2 * Din * x_it + 2 * Dout * w_it + Dout * 4
    avail = vmem_budget_bytes - resident
    if avail < row_bytes * align:
        # TODO(synk): weight alone exceeds the budget -> needs a Dout grid axis.
        tm = align
    else:
        tm = max(align, min(1024, avail // row_bytes))
    tm = min(_round_up(tm, align), _round_up(M, align))
    if tm >= M:
        tm = M                                         # full-extent block always legal
    grid_m = pl.cdiv(M, tm)
    if grid_m == 1 and M > align:                      # keep both v7x TensorCores busy
        tm = _round_up(pl.cdiv(M, 2), align)
        grid_m = pl.cdiv(M, tm)

    vmem_limit = min(max(vmem_budget_bytes, resident + tm * row_bytes + (2 << 20)),
                     96 * 1024 * 1024)

    b2 = b.reshape(1, Dout)
    out_dtype = w.dtype                                # narrow activations downstream
    kernel = functools.partial(_fused_linear_kernel, out_widths=tuple(out_widths))
    return pl.pallas_call(
        kernel,
        out_shape=tuple(jax.ShapeDtypeStruct((M, wd), out_dtype) for wd in out_widths),
        grid_spec=pltpu.PrefetchScalarGridSpec(
            num_scalar_prefetch=0,
            grid=(grid_m,),
            in_specs=[
                pl.BlockSpec((tm, Din), lambda i: (i, 0)),     # activations: tiled over M
                pl.BlockSpec((Din, Dout), lambda i: (0, 0)),   # weights: resident
                pl.BlockSpec((1, Dout), lambda i: (0, 0)),     # bias: resident
            ],
            out_specs=tuple(pl.BlockSpec((tm, wd), lambda i: (i, 0)) for wd in out_widths),
        ),
        compiler_params=pltpu.CompilerParams(
            dimension_semantics=("parallel",),
            vmem_limit_bytes=vmem_limit,
        ),
    )(x, w, b2)


# ----------------------------------------------------------------------------
# Flash-style attention fused with the output projection.
#   grid = (B, Sq_tiles, Sk_tiles);   softmax state lives in VMEM scratch.
# ----------------------------------------------------------------------------
def _attn_kernel(q_ref, k_ref, v_ref, wo_ref, bo_ref, o_ref,
                 m_sc, l_sc, acc_sc, *, n_heads, head_dim, scale):
    ki = pl.program_id(2)

    @pl.when(ki == 0)
    def _():
        m_sc[...] = jnp.full(m_sc.shape, -jnp.inf, dtype=m_sc.dtype)
        l_sc[...] = jnp.zeros(l_sc.shape, dtype=l_sc.dtype)
        acc_sc[...] = jnp.zeros(acc_sc.shape, dtype=acc_sc.dtype)

    for h in range(n_heads):
        sl = slice(h * head_dim, (h + 1) * head_dim)
        qh = q_ref[0, :, sl] * scale                   # scale folded into q
        kh = k_ref[0, :, sl]
        vh = v_ref[0, :, sl]
        # q @ k^T without materializing a transpose (contract the Dk axis of both).
        s = lax.dot_general(qh, kh, (((1,), (1,)), ((), ())),
                            preferred_element_type=jnp.float32)     # (tq, tk) f32
        m_prev = m_sc[:, h:h + 1]
        m_new = jnp.maximum(m_prev, jnp.max(s, axis=-1, keepdims=True))
        alpha = jnp.exp(m_prev - m_new)
        p = jnp.exp(s - m_new)
        l_sc[:, h:h + 1] = alpha * l_sc[:, h:h + 1] + jnp.sum(p, axis=-1, keepdims=True)
        acc_sc[:, sl] = alpha * acc_sc[:, sl] + jnp.dot(
            p.astype(vh.dtype), vh, preferred_element_type=jnp.float32)
        m_sc[:, h:h + 1] = m_new

    @pl.when(ki == pl.num_programs(2) - 1)
    def _():
        # Per-head normalization (exact divide), written back into the scratch slab.
        for h in range(n_heads):
            sl = slice(h * head_dim, (h + 1) * head_dim)
            acc_sc[:, sl] = acc_sc[:, sl] / l_sc[:, h:h + 1]
        # Fused to_out: one wide (contracting over full model_dim) MXU matmul,
        # then a single lane-dense store. Head merge == lane layout of acc_sc.
        attn = acc_sc[...].astype(wo_ref.dtype)
        out = jnp.dot(attn, wo_ref[...], preferred_element_type=jnp.float32)
        out = out + bo_ref[...].astype(jnp.float32)
        o_ref[0] = out.astype(o_ref.dtype)


def pallas_attention(qp, kp, vp, wo, bo, n_heads, out_dtype, *,
                     tq_target=128, tk_target=128,
                     vmem_limit_bytes=VMEM_BUDGET_BYTES):
    """qp:(B,Sq,Dm), kp/vp:(B,Sk,Dm), wo:(Dm,Dq), bo:(Dq,) -> (B,Sq,Dq)."""
    B, Sq, Dm = qp.shape
    _, Sk, _ = kp.shape
    Dq = wo.shape[1]
    assert Dm % n_heads == 0
    head_dim = Dm // n_heads
    scale = float(head_dim) ** (-0.5)

    align = 16 if jnp.dtype(qp.dtype).itemsize < 4 else 8
    tq_t = tq_target
    if B == 1:                                       # give v7x's 2nd TensorCore work
        tq_t = min(tq_t, max(align, _round_up(pl.cdiv(Sq, 2), align)))
    tq = _pick_tile(Sq, tq_t, align)
    tk = _pick_tile(Sk, tk_target, align)
    grid = (B, Sq // tq, Sk // tk)

    bo2 = bo.reshape(1, Dq)
    kernel = functools.partial(
        _attn_kernel, n_heads=n_heads, head_dim=head_dim, scale=scale)
    return pl.pallas_call(
        kernel,
        out_shape=jax.ShapeDtypeStruct((B, Sq, Dq), out_dtype),
        grid_spec=pltpu.PrefetchScalarGridSpec(
            num_scalar_prefetch=0,
            grid=grid,
            in_specs=[
                pl.BlockSpec((1, tq, Dm), lambda b, qi, ki: (b, qi, 0)),
                pl.BlockSpec((1, tk, Dm), lambda b, qi, ki: (b, ki, 0)),
                pl.BlockSpec((1, tk, Dm), lambda b, qi, ki: (b, ki, 0)),
                pl.BlockSpec((Dm, Dq), lambda b, qi, ki: (0, 0)),    # wo: resident
                pl.BlockSpec((1, Dq), lambda b, qi, ki: (0, 0)),     # bo: resident
            ],
            out_specs=pl.BlockSpec((1, tq, Dq), lambda b, qi, ki: (b, qi, 0)),
            scratch_shapes=[
                pltpu.VMEM((tq, n_heads), jnp.float32),   # running max per head
                pltpu.VMEM((tq, n_heads), jnp.float32),   # running denom per head
                pltpu.VMEM((tq, Dm), jnp.float32),        # un-normalized head outputs
            ],
        ),
        compiler_params=pltpu.CompilerParams(
            dimension_semantics=("parallel", "parallel", "arbitrary"),
            vmem_limit_bytes=vmem_limit_bytes,
        ),
    )(qp, kp, vp, wo, bo2)


# ----------------------------------------------------------------------------
# CrossAttention2D wrapper (use_conv=False, separate=True, eval mode)
# ----------------------------------------------------------------------------
class CrossAttention2D:
    def __init__(self, key, n_heads, model_dim, query_dim=None, context_dim=None,
                 dtype=jnp.float32):
        assert model_dim % n_heads == 0
        self.n_heads = n_heads
        self.model_dim = model_dim
        self.head_dim = model_dim // n_heads
        self.query_dim = query_dim or model_dim
        self.context_dim = context_dim or model_dim

        ks = jax.random.split(key, 8)
        s = 0.05  # deterministic small-scale init (synthetic weights)
        # nn.Linear weights are (out, in); stored transposed (in, out).
        self.wq = (jax.random.normal(ks[0], (self.query_dim, model_dim)) * s).astype(dtype)
        self.bq = (jax.random.normal(ks[1], (model_dim,)) * s).astype(dtype)
        self.wk = (jax.random.normal(ks[2], (self.context_dim, model_dim)) * s).astype(dtype)
        self.bk = (jax.random.normal(ks[3], (model_dim,)) * s).astype(dtype)
        self.wv = (jax.random.normal(ks[4], (self.context_dim, model_dim)) * s).astype(dtype)
        self.bv = (jax.random.normal(ks[5], (model_dim,)) * s).astype(dtype)
        # to_out: Linear(model_dim, query_dim) then dropout ('ld'); eval -> linear only.
        self.wo = (jax.random.normal(ks[6], (model_dim, self.query_dim)) * s).astype(dtype)
        self.bo = (jax.random.normal(ks[7], (self.query_dim,)) * s).astype(dtype)

        # Pre-fused weights (single HBM read of the shared activation).
        self.w_kv = jnp.concatenate([self.wk, self.wv], axis=1)
        self.b_kv = jnp.concatenate([self.bk, self.bv], axis=0)
        if self.query_dim == self.context_dim:
            self.w_qkv = jnp.concatenate([self.wq, self.wk, self.wv], axis=1)
            self.b_qkv = jnp.concatenate([self.bq, self.bk, self.bv], axis=0)
        else:
            self.w_qkv = None

    def __call__(self, q, k=None, v=None):
        # get_qkv
        k_in = q if k is None else k
        v_in = q if v is None else v
        B, Sq, _ = q.shape
        _, Sk, _ = k_in.shape
        Dm = self.model_dim

        # Projections (tiled / fused Pallas matmul kernels).
        if (k_in is q) and (v_in is q) and (self.w_qkv is not None):
            # Self-attention: one fused QKV matmul.
            qp, kp, vp = pallas_fused_linear(
                q.reshape(B * Sq, -1), self.w_qkv, self.b_qkv, (Dm, Dm, Dm))
        elif k_in is v_in:
            # Shared context: fused K/V matmul.
            (qp,) = pallas_fused_linear(q.reshape(B * Sq, -1), self.wq, self.bq, (Dm,))
            kp, vp = pallas_fused_linear(
                k_in.reshape(B * Sk, -1), self.w_kv, self.b_kv, (Dm, Dm))
        else:
            (qp,) = pallas_fused_linear(q.reshape(B * Sq, -1), self.wq, self.bq, (Dm,))
            (kp,) = pallas_fused_linear(k_in.reshape(B * Sk, -1), self.wk, self.bk, (Dm,))
            (vp,) = pallas_fused_linear(v_in.reshape(B * Sk, -1), self.wv, self.bv, (Dm,))

        qp = qp.reshape(B, Sq, Dm)
        kp = kp.reshape(B, Sk, Dm)
        vp = vp.reshape(B, Sk, Dm)

        # ScaleAttend (head split / online softmax / head merge) + to_out linear,
        # all inside one flash-style kernel. Dropout is identity in eval.
        return pallas_attention(qp, kp, vp, self.wo, self.bo, self.n_heads,
                                out_dtype=q.dtype)


# ----------------------------------------------------------------------------
if __name__ == "__main__":
    key = jax.random.PRNGKey(0)
    kparam, kq, kk, kv = jax.random.split(key, 4)

    B, Sq, Sk = 2, 8, 8
    n_heads, model_dim = 4, 32          # head_dim = 8
    query_dim = context_dim = 32

    module = CrossAttention2D(kparam, n_heads=n_heads, model_dim=model_dim,
                              query_dim=query_dim, context_dim=context_dim)

    q = jax.random.normal(kq, (B, Sq, query_dim), dtype=jnp.float32)
    ctx = jax.random.normal(kk, (B, Sk, context_dim), dtype=jnp.float32)
    v_other = jax.random.normal(kv, (B, Sk, context_dim), dtype=jnp.float32)

    # Pure-JAX f32 reference of the full forward pass.
    def ref_forward(m, q, k=None, v=None):
        k = q if k is None else k
        v = q if v is None else v

        def lin(x, w, b):
            return x @ w.astype(jnp.float32) + b.astype(jnp.float32)

        B_, Sq_, _ = q.shape
        _, Sk_, _ = k.shape
        H, Dk = m.n_heads, m.head_dim
        qp = lin(q, m.wq, m.bq).reshape(B_, Sq_, H, Dk).transpose(0, 2, 1, 3)
        kp = lin(k, m.wk, m.bk).reshape(B_, Sk_, H, Dk).transpose(0, 2, 1, 3)
        vp = lin(v, m.wv, m.bv).reshape(B_, Sk_, H, Dk).transpose(0, 2, 1, 3)
        sim = jnp.einsum('bhqd,bhkd->bhqk', qp, kp) * (Dk ** -0.5)
        p = jax.nn.softmax(sim, axis=-1)
        a = jnp.einsum('bhqk,bhkd->bhqd', p, vp)
        a = a.transpose(0, 2, 1, 3).reshape(B_, Sq_, m.model_dim)
        return lin(a, m.wo, m.bo)

    # 1) cross-attention with shared k/v (fused KV projection path)
    out1 = module(q, ctx, ctx)
    jax.block_until_ready(out1)
    ref1 = ref_forward(module, q, ctx, ctx)
    assert out1.shape == (B, Sq, query_dim)
    assert jnp.allclose(out1, ref1, atol=2e-3, rtol=2e-3), \
        float(jnp.max(jnp.abs(out1 - ref1)))

    # 2) self-attention (fused QKV projection path)
    out2 = module(q)
    jax.block_until_ready(out2)
    ref2 = ref_forward(module, q)
    assert jnp.allclose(out2, ref2, atol=2e-3, rtol=2e-3), \
        float(jnp.max(jnp.abs(out2 - ref2)))

    # 3) fully separate q, k, v (separate projection path)
    out3 = module(q, ctx, v_other)
    jax.block_until_ready(out3)
    ref3 = ref_forward(module, q, ctx, v_other)
    assert jnp.allclose(out3, ref3, atol=2e-3, rtol=2e-3), \
        float(jnp.max(jnp.abs(out3 - ref3)))

    # 4) bf16 compute path (weights bf16, f32 accumulation) -- loose tolerance.
    module_bf16 = CrossAttention2D(kparam, n_heads=n_heads, model_dim=model_dim,
                                   query_dim=query_dim, context_dim=context_dim,
                                   dtype=jnp.bfloat16)
    out4 = module_bf16(q, ctx, ctx)
    jax.block_until_ready(out4)
    ref4 = ref_forward(module_bf16, q, ctx, ctx)
    assert out4.shape == (B, Sq, query_dim)
    assert jnp.allclose(out4.astype(jnp.float32), ref4, atol=5e-2, rtol=5e-2), \
        float(jnp.max(jnp.abs(out4.astype(jnp.float32) - ref4)))

    print("KERNEL_OK")
</pallas_src>

<mosaic_0001>
module attributes {stable_mosaic.version = 11 : i64} {
  func.func @_fused_linear_kernel(%arg0: i32, %arg1: memref<8x32xf32, #tpu.memory_space<vmem>>, %arg2: memref<32x32xf32, #tpu.memory_space<vmem>>, %arg3: memref<1x32xf32, #tpu.memory_space<vmem>>, %arg4: memref<8x32xf32, #tpu.memory_space<vmem>>) attributes {dimension_semantics = [#tpu.dimension_semantics<parallel>], iteration_bounds = array<i64: 2>, scalar_prefetch = 0 : i64, scratch_operands = 0 : i64, tpu.core_type = #tpu.core_type<tc>, window_params = [{transform_indices = @transform_0, window_bounds = array<i64: 8, 32>}, {pipeline_mode = #tpu.pipeline_mode<synchronous>, transform_indices = @transform_1, window_bounds = array<i64: 32, 32>}, {pipeline_mode = #tpu.pipeline_mode<synchronous>, transform_indices = @transform_2, window_bounds = array<i64: 1, 32>}, {transform_indices = @transform_3, window_bounds = array<i64: 8, 32>}]} {
    %c0 = arith.constant 0 : index
    %c0_0 = arith.constant 0 : index
    %0 = vector.load %arg1[%c0, %c0_0] : memref<8x32xf32, #tpu.memory_space<vmem>>, vector<8x32xf32>
    %c0_1 = arith.constant 0 : index
    %c0_2 = arith.constant 0 : index
    %1 = vector.load %arg2[%c0_1, %c0_2] : memref<32x32xf32, #tpu.memory_space<vmem>>, vector<32x32xf32>
    %cst = arith.constant dense<0.000000e+00> : vector<8x32xf32>
    %2 = tpu.matmul %0, %1, %cst {dimension_numbers = #tpu.dot_dimension_numbers<[1], [0], [0], [1], [0, 0, 1, 1], [], []>} : vector<8x32xf32>, vector<32x32xf32>, vector<8x32xf32> -> vector<8x32xf32>
    %c0_3 = arith.constant 0 : index
    %c0_4 = arith.constant 0 : index
    %3 = vector.load %arg3[%c0_3, %c0_4] : memref<1x32xf32, #tpu.memory_space<vmem>>, vector<1x32xf32>
    %4 = vector.broadcast %3 : vector<1x32xf32> to vector<8x32xf32>
    %5 = arith.addf %2, %4 : vector<8x32xf32>
    %c0_5 = arith.constant 0 : index
    %c0_6 = arith.constant 0 : index
    %6 = vector.load %arg4[%c0_5, %c0_6] : memref<8x32xf32, #tpu.memory_space<vmem>>, vector<8x32xf32>
    tpu.vector_store %arg4[%c0_5, %c0_6], %5 {strides = array<i32>} : memref<8x32xf32, #tpu.memory_space<vmem>>, vector<8x32xf32>,
    return
  }
  func.func @transform_0(%arg0: i32) -> (i32, i32) {
    %c0_i32 = arith.constant 0 : i32
    %c0_i32_0 = arith.constant 0 : i32
    return %arg0, %c0_i32 : i32, i32
  }
  func.func @transform_1(%arg0: i32) -> (i32, i32) {
    %c0_i32 = arith.constant 0 : i32
    %c0_i32_0 = arith.constant 0 : i32
    %c0_i32_1 = arith.constant 0 : i32
    return %c0_i32, %c0_i32_0 : i32, i32
  }
  func.func @transform_2(%arg0: i32) -> (i32, i32) {
    %c0_i32 = arith.constant 0 : i32
    %c0_i32_0 = arith.constant 0 : i32
    %c0_i32_1 = arith.constant 0 : i32
    return %c0_i32, %c0_i32_0 : i32, i32
  }
  func.func @transform_3(%arg0: i32) -> (i32, i32) {
    %c0_i32 = arith.constant 0 : i32
    %c0_i32_0 = arith.constant 0 : i32
    return %arg0, %c0_i32 : i32, i32
  }
}

</mosaic_0001>

<llo_original>
// kernel: tpu_custom_call.1
$region0: #{tpu_custom_call.1}
  #allocation0 [shape = 'u32[]', space=smem, size = 0x4, offset = 0x4, fixed_abs, tag = 'smem constant byte address 0x4 - core index']
  #allocation1 [shape = 'u32[144,128]{1,0:T(1,128)}', space=vmem, size = 0x12000, scoped, tag = 'internal scratch']
  %s0 = inlined_call_operand.hbm [shape: f32[16,32], index: 0, kind: input, shape index: {}]
  %s1 = inlined_call_operand.hbm [shape: f32[32,32], index: 1, kind: input, shape index: {}]
  %s2 = inlined_call_operand.vmem [shape: f32[1,32], index: 2, kind: input, shape index: {}]
  %s3 = inlined_call_operand.hbm [shape: f32[16,32], index: 3, kind: output, shape index: {}]
  %s4 = sld [smem:[#allocation0]]
  $region53: #{tpu_custom_call.1} parent=0
    _
  %s6 = ssub.s32 1, %s4
  %s7 = scalar_select 0, %s6, %s4
  $region1: #{tpu_custom_call.1} parent=0
    #allocation2 [shape = 'u8[8192]{0}', space=vmem, size = 0x2000, scoped, tag = 'input window, operand 0']
    #allocation3 [shape = 's32[2]{0}', space=sflag, size = 0x8, scoped, tag = 'scoped memory for tpu_custom_call.1']
    #allocation4 [shape = 's32[2]{0}', space=sflag, size = 0x8, scoped, tag = 'scoped memory for tpu_custom_call.1']
    #allocation5 [shape = 'u8[16384]{0}', space=vmem, size = 0x4000, scoped, tag = 'input window, operand 1, single buffered']
    #allocation6 [shape = 's32[1]{0}', space=sflag, size = 0x4, scoped, tag = 'scoped memory for tpu_custom_call.1']
    #allocation7 [shape = 'u8[8192]{0}', space=vmem, size = 0x2000, scoped, tag = 'output window, operand 0']
    %8 = vsyncpa [#allocation3], 0
    %s9 = scalar_lea.sflag [#allocation3], 1
    %10 = vsyncpa %s9, 0
    %11 = vsyncpa [#allocation6], 0
    %12 = vsyncpa [#allocation4], 0
    %s13 = scalar_lea.sflag [#allocation4], 1
    %14 = vsyncpa %s13, 0
    loop: start=0, step=1, limit=4
    $region2: #{tpu_custom_call.1} parent=1 // loop_pre_header
      _
    $region3: #{tpu_custom_call.1} parent=1 // loop_header
      %s16 = sphi 0, %s20
      %p17 = scmp.ge.s32.totalorder %s16, 4
      %s26 = sphi 0, %s28
      %s29 = sphi 0, %s26
      %s30 = sphi 0, %s29
      %s46 = sphi 0, %s30
      %s50 = sphi 0, %s50
      %s52 = sphi 0, %s50
      %s53 = sphi 0, %s52
      %s67 = sphi 0, %s53
      %s71 = sphi 0, %s71
      %s73 = sphi 0, %s71
      %s74 = sphi 0, %s73
      %s88 = sphi 0, %s74
      %s94 = sphi 0, %s96
      %s97 = sphi 0, %s94
      %s98 = sphi 0, %s97
      %s114 = sphi 0, %s98
    $region4: #{tpu_custom_call.1} parent=1 // loop_header_branch
      %19 = sbr.rel (%p17) target = $region8
    $region5: #{tpu_custom_call.1} parent=1 // loop_body
      %s21 = ssub.s32 %s16, 1
      %s22 = ssub.s32 %s16, 2
      %s23 = sadd.s32 %s16, 1
      %s24 = ssub.s32 %s16, %s23
      %p25 = scmp.eq.s32.totalorder %s24, 0
      %s27 = sadd.s32 %s26, 1
      %s28 = scalar_select %p25, %s26, %s27
      %p31 = pneg %p25
      %p32 = scmp.eq.s32.totalorder %s16, 1
      %p33 = por %p31, %p32
      %p34 = scmp.ne.s32.totalorder %s26, %s29
      %p35 = scmp.eq.s32.totalorder %s16, 0
      %p36 = por %p34, %p35
      %p37 = scmp.ne.s32.totalorder %s26, %s29
      %p38 = scmp.eq.s32.totalorder %s21, 1
      %p39 = por %p37, %p38
      %p40 = scmp.ne.s32.totalorder %s29, %s30
      %p41 = scmp.eq.s32.totalorder %s21, 0
      %p42 = por %p40, %p41
      %p43 = scmp.ne.s32.totalorder %s29, %s30
      %p44 = scmp.eq.s32.totalorder %s22, 1
      %p45 = por %p43, %p44
      %p47 = scmp.ne.s32.totalorder %s30, %s46
      %p48 = scmp.eq.s32.totalorder %s22, 0
      %p49 = por %p47, %p48
      %s51 = sadd.s32 %s50, 1
      %p54 = scmp.eq.s32.totalorder %s16, 1
      %p55 = scmp.ne.s32.totalorder %s50, %s52
      %p56 = scmp.eq.s32.totalorder %s16, 0
      %p57 = por %p55, %p56
      %p58 = scmp.ne.s32.totalorder %s50, %s52
      %p59 = scmp.eq.s32.totalorder %s21, 1
      %p60 = por %p58, %p59
      %p61 = scmp.ne.s32.totalorder %s52, %s53
      %p62 = scmp.eq.s32.totalorder %s21, 0
      %p63 = por %p61, %p62
      %p64 = scmp.ne.s32.totalorder %s52, %s53
      %p65 = scmp.eq.s32.totalorder %s22, 1
      %p66 = por %p64, %p65
      %p68 = scmp.ne.s32.totalorder %s53, %s67
      %p69 = scmp.eq.s32.totalorder %s22, 0
      %p70 = por %p68, %p69
      %s72 = sadd.s32 %s71, 1
      %p75 = scmp.eq.s32.totalorder %s16, 1
      %p76 = scmp.ne.s32.totalorder %s71, %s73
      %p77 = scmp.eq.s32.totalorder %s16, 0
      %p78 = por %p76, %p77
      %p79 = scmp.ne.s32.totalorder %s71, %s73
      %p80 = scmp.eq.s32.totalorder %s21, 1
      %p81 = por %p79, %p80
      %p82 = scmp.ne.s32.totalorder %s73, %s74
      %p83 = scmp.eq.s32.totalorder %s21, 0
      %p84 = por %p82, %p83
      %p85 = scmp.ne.s32.totalorder %s73, %s74
      %p86 = scmp.eq.s32.totalorder %s22, 1
      %p87 = por %p85, %p86
      %p89 = scmp.ne.s32.totalorder %s74, %s88
      %p90 = scmp.eq.s32.totalorder %s22, 0
      %p91 = por %p89, %p90
      %s92 = ssub.s32 %s16, %s23
      %p93 = scmp.eq.s32.totalorder %s92, 0
      %s95 = sadd.s32 %s94, 1
      %s96 = scalar_select %p93, %s94, %s95
      %p99 = pneg %p93
      %p100 = scmp.eq.s32.totalorder %s16, 1
      %p101 = por %p99, %p100
      %p102 = scmp.ne.s32.totalorder %s94, %s97
      %p103 = scmp.eq.s32.totalorder %s16, 0
      %p104 = por %p102, %p103
      %p105 = scmp.ne.s32.totalorder %s94, %s97
      %p106 = scmp.eq.s32.totalorder %s21, 1
      %p107 = por %p105, %p106
      %p108 = scmp.ne.s32.totalorder %s97, %s98
      %p109 = scmp.eq.s32.totalorder %s21, 0
      %p110 = por %p108, %p109
      %p111 = scmp.ne.s32.totalorder %s97, %s98
      %p112 = scmp.eq.s32.totalorder %s22, 1
      %p113 = por %p111, %p112
      %p115 = scmp.ne.s32.totalorder %s98, %s114
      %p116 = scmp.eq.s32.totalorder %s22, 0
      %p117 = por %p115, %p116
      %p118 = scmp.le.s32.totalorder 1, %s16
      %p119 = scmp.lt.s32.totalorder %s16, 3
      %p120 = pnand %p118, %p119
      %p121 = pneg %p120
      // Predicated region
      $region9: #{tpu_custom_call.1} parent=5 // pred_check
        _
      $region10: #{tpu_custom_call.1} parent=5 // pred_check_branch
        %123 = sbr.rel (%p120) target = $region12
      $region11: #{tpu_custom_call.1} parent=5 // pred_region
        %s124 = ssub.s32 %s16, 1
        // Predicated region
        $region13: #{tpu_custom_call.1} parent=11 // pred_check
          %p125 = pneg %p63
        $region14: #{tpu_custom_call.1} parent=11 // pred_check_branch
          %127 = sbr.rel (%p125) target = $region16
        $region15: #{tpu_custom_call.1} parent=11 // pred_region
          %s129 = ssub.s32 512, 512
          %130 = vsyncadd [#allocation6], %s129
          %s131 = sshll.u32 [#allocation5], 4
          %s132 = int_to_ptr.vmem [resolvable:$true] %s131
          %137 = dma.hbm_to_vmem [thread:$0]  %s1, 512, %s132, [#allocation6], 128, 128, 8
        $region16: #{tpu_custom_call.1} parent=11 // pred_fallthru
          _
        // Predicated region
        $region17: #{tpu_custom_call.1} parent=11 // pred_check
          %p138 = pneg %p84
        $region18: #{tpu_custom_call.1} parent=11 // pred_check_branch
          %140 = sbr.rel (%p138) target = $region20
        $region19: #{tpu_custom_call.1} parent=11 // pred_region
          _
        $region20: #{tpu_custom_call.1} parent=11 // pred_fallthru
          _
      $region12: #{tpu_custom_call.1} parent=5 // pred_fallthru
        _
      %p141 = scmp.lt.s32.totalorder %s16, 2
      // Predicated region
      $region21: #{tpu_custom_call.1} parent=5 // pred_check
        %p142 = pneg %p141
      $region22: #{tpu_custom_call.1} parent=5 // pred_check_branch
        %144 = sbr.rel (%p142) target = $region24
      $region23: #{tpu_custom_call.1} parent=5 // pred_region
        // Predicated region
        $region25: #{tpu_custom_call.1} parent=23 // pred_check
          %p145 = pneg %p36
        $region26: #{tpu_custom_call.1} parent=23 // pred_check_branch
          %147 = sbr.rel (%p145) target = $region28
        $region27: #{tpu_custom_call.1} parent=23 // pred_region
          %s148 = sand.u32 %s26, 1
          %s149 = scalar_lea.sflag [#allocation3], %s148
          %s150 = sand.u32 %s26, 1
          %s151 = smul.addr %s150, 8
          %s152 = scalar_lea.vmem [#allocation2], %s151
          %s154 = ssub.s32 128, 128
          %155 = vsyncadd %s149, %s154
          %s156 = smul.addr %s16, 128
          %s157 = scalar_lea.hbm %s0, %s156
          %s159 = sshll.u32 %s152, 4
          %s160 = int_to_ptr.vmem [resolvable:$true] %s159
          %162 = dma.hbm_to_vmem [thread:$0]  %s157, 128, %s160, %s149
        $region28: #{tpu_custom_call.1} parent=23 // pred_fallthru
          _
      $region24: #{tpu_custom_call.1} parent=5 // pred_fallthru
        _
      %p163 = scmp.le.s32.totalorder 1, %s16
      %p164 = scmp.lt.s32.totalorder %s16, 3
      %p165 = pnand %p163, %p164
      %p166 = pneg %p165
      // Predicated region
      $region29: #{tpu_custom_call.1} parent=5 // pred_check
        _
      $region30: #{tpu_custom_call.1} parent=5 // pred_check_branch
        %168 = sbr.rel (%p165) target = $region32
      $region31: #{tpu_custom_call.1} parent=5 // pred_region
        %s169 = ssub.s32 %s16, 1
        %s170 = sand.u32 %s29, 1
        %s171 = scalar_lea.sflag [#allocation3], %s170
        %s172 = sand.u32 %s29, 1
        %s173 = smul.addr %s172, 8
        %s174 = scalar_lea.vmem [#allocation2], %s173
        // Predicated region
        $region33: #{tpu_custom_call.1} parent=31 // pred_check
          %p175 = pneg %p42
        $region34: #{tpu_custom_call.1} parent=31 // pred_check_branch
          %177 = sbr.rel (%p175) target = $region36
        $region35: #{tpu_custom_call.1} parent=31 // pred_region
          %178 = dma.done %s171, 128
        $region36: #{tpu_custom_call.1} parent=31 // pred_fallthru
          _
        // Predicated region
        $region37: #{tpu_custom_call.1} parent=31 // pred_check
          %p179 = pneg %p63
        $region38: #{tpu_custom_call.1} parent=31 // pred_check_branch
          %181 = sbr.rel (%p179) target = $region40
        $region39: #{tpu_custom_call.1} parent=31 // pred_region
          %182 = dma.done [#allocation6], 512
        $region40: #{tpu_custom_call.1} parent=31 // pred_fallthru
          _
        %s183 = sand.u32 %s29, 1
        %s184 = scalar_lea.sflag [#allocation3], %s183
        %s185 = sand.u32 %s29, 1
        %s186 = smul.addr %s185, 8
        %s187 = scalar_lea.vmem [#allocation2], %s186
        %p188 = pneg %p42
        %p189 = pneg %p39
        %p190 = pneg %p63
        %p191 = pneg %p60
        %p192 = pneg %p84
        %p193 = pneg %p81
        %p194 = pneg %p110
        %p195 = pneg %p107
        %s196 = sand.u32 %s97, 1
        %s197 = scalar_lea.sflag [#allocation4], %s196
        %s198 = sand.u32 %s97, 1
        %s199 = smul.addr %s198, 8
        %s200 = scalar_lea.vmem [#allocation7], %s199
        %v201 = vld [vmem:[%s174] sm:$0xff]
        %v202 = vld [vmem:[#allocation5] sm:$0xff]
        %v203 = vld [vmem:[#allocation5 + $0x8] sm:$0xff]
        %v204 = vld [vmem:[#allocation5 + $0x10] sm:$0xff]
        %v205 = vld [vmem:[#allocation5 + $0x18] sm:$0xff]
        %v206 = vld [vmem:[%s2] sm:$0x1]
        %v208 = vlaneseq
        %v209 = vshrl.u32 %v208, 7
        %v210 = vsub.s32 0, %v209
        %v211 = vrot.slane %v206, %v210
        %vm213 = vcmask 261120
        %v215 = vsel %vm213, %v201, 0
        %217 = vmatprep.subr.mxu0 0.0
        %218 = vmatpush1.msra.mxu0 %v202
        %219 = vmatprep.subr.mxu0 0.0
        %220 = vmatpush1.msra.mxu0 %v203
        %221 = vmatprep.subr.mxu0 0.0
        %222 = vmatpush1.msra.mxu0 %v204
        %223 = vmatprep.subr.mxu0 0.0
        %224 = vmatpush1.msra.mxu0 %v205
        %225 = vmatprep.subr.mxu0 0.0
        %226 = vmatpush1.msra.mxu0 0.0
        %227 = vmatprep.subr.mxu0 0.0
        %228 = vmatpush1.msra.mxu0 0.0
        %229 = vmatprep.subr.mxu0 0.0
        %230 = vmatpush1.msra.mxu0 0.0
        %231 = vmatprep.subr.mxu0 0.0
        %232 = vmatpush1.msra.mxu0 0.0
        %233 = vmatprep.subr.mxu0 0.0
        %234 = vmatpush1.msra.mxu0 0.0
        %235 = vmatprep.subr.mxu0 0.0
        %236 = vmatpush1.msra.mxu0 0.0
        %237 = vmatprep.subr.mxu0 0.0
        %238 = vmatpush1.msra.mxu0 0.0
        %239 = vmatprep.subr.mxu0 0.0
        %240 = vmatpush1.msra.mxu0 0.0
        %241 = vmatprep.subr.mxu0 0.0
        %242 = vmatpush1.msra.mxu0 0.0
        %243 = vmatprep.subr.mxu0 0.0
        %244 = vmatpush1.msra.mxu0 0.0
        %245 = vmatprep.subr.mxu0 0.0
        %246 = vmatpush1.msra.mxu0 0.0
        %247 = vmatprep.subr.mxu0 0.0
        %248 = vmatpush1.msra.mxu0 0.0
        %249 = vmatprep.subr.mxu0 0.0
        %250 = vmatpush1.msra.mxu0 0.0
        %251 = vmatprep.subr.mxu0 0.0
        %252 = vmatpush1.msra.mxu0 0.0
        %253 = vmatprep.subr.mxu0 0.0
        %254 = vmatpush1.msra.mxu0 0.0
        %255 = vmatprep.subr.mxu0 0.0
        %256 = vmatpush1.msra.mxu0 0.0
        %257 = vmatprep.subr.mxu0 0.0
        %258 = vmatpush1.msra.mxu0 0.0
        %259 = vmatprep.subr.mxu0 0.0
        %260 = vmatpush1.msra.mxu0 0.0
        %261 = vmatprep.subr.mxu0 0.0
        %262 = vmatpush1.msra.mxu0 0.0
        %263 = vmatprep.subr.mxu0 0.0
        %264 = vmatpush1.msra.mxu0 0.0
        %265 = vmatprep.subr.mxu0 0.0
        %266 = vmatpush1.msra.mxu0 0.0
        %267 = vmatprep.subr.mxu0 0.0
        %268 = vmatpush1.msra.mxu0 0.0
        %269 = vmatprep.subr.mxu0 0.0
        %270 = vmatpush1.msra.mxu0 0.0
        %271 = vmatprep.subr.mxu0 0.0
        %272 = vmatpush1.msra.mxu0 0.0
        %273 = vmatprep.subr.mxu0 0.0
        %274 = vmatpush1.msra.mxu0 0.0
        %275 = vmatprep.subr.mxu0 0.0
        %276 = vmatpush1.msra.mxu0 0.0
        %277 = vmatprep.subr.mxu0 0.0
        %278 = vmatpush1.msra.mxu0 0.0
        %279 = vmatprep.subr.mxu0 0.0
        %280 = vmatpush1.msra.mxu0 0.0
        %281 = vmatprep.mubr.f32.mxu0 0.0
        %282 = vmatmul.mubr.f32.gmra.mrb[0].mxu0 %v215
        %v283 = vpop.f32.mrb[0].mxu0
        %v284 = vadd.f32 %v211, %v283
        %v285 = vpop.f32.mrb[0].mxu0
        %286 = vdwg.mxu0
        %287 = vst.msk [vmem:[%s200] sm:$0xff] %vm213, %v284
        %s288 = sand.u32 %s97, 1
        %s289 = scalar_lea.sflag [#allocation4], %s288
        %s290 = sand.u32 %s97, 1
        %s291 = smul.addr %s290, 8
        %s292 = scalar_lea.vmem [#allocation7], %s291
        // Predicated region
        $region41: #{tpu_custom_call.1} parent=31 // pred_check
          %p293 = pneg %p107
        $region42: #{tpu_custom_call.1} parent=31 // pred_check_branch
          %295 = sbr.rel (%p293) target = $region44
        $region43: #{tpu_custom_call.1} parent=31 // pred_region
          %s297 = ssub.s32 128, 128
          %298 = vsyncadd %s289, %s297
          %s299 = smul.addr %s21, 128
          %s300 = scalar_lea.hbm %s3, %s299
          %s302 = sshll.u32 %s292, 4
          %s303 = int_to_ptr.vmem [resolvable:$true] %s302
          %305 = dma.vmem_to_hbm [thread:$0]  %s303, 128, %s300, %s289
        $region44: #{tpu_custom_call.1} parent=31 // pred_fallthru
          _
      $region32: #{tpu_custom_call.1} parent=5 // pred_fallthru
        _
      %p306 = scmp.le.s32.totalorder 2, %s16
      // Predicated region
      $region45: #{tpu_custom_call.1} parent=5 // pred_check
        %p307 = pneg %p306
      $region46: #{tpu_custom_call.1} parent=5 // pred_check_branch
        %309 = sbr.rel (%p307) target = $region48
      $region47: #{tpu_custom_call.1} parent=5 // pred_region
        %s310 = ssub.s32 %s16, 2
        // Predicated region
        $region49: #{tpu_custom_call.1} parent=47 // pred_check
          %p311 = pneg %p113
        $region50: #{tpu_custom_call.1} parent=47 // pred_check_branch
          %313 = sbr.rel (%p311) target = $region52
        $region51: #{tpu_custom_call.1} parent=47 // pred_region
          %s314 = sand.u32 %s98, 1
          %s315 = scalar_lea.sflag [#allocation4], %s314
          %s316 = sand.u32 %s98, 1
          %s317 = smul.addr %s316, 8
          %s318 = scalar_lea.vmem [#allocation7], %s317
          %319 = dma.done %s315, 128
        $region52: #{tpu_custom_call.1} parent=47 // pred_fallthru
          _
      $region48: #{tpu_custom_call.1} parent=5 // pred_fallthru
        _
    $region6: #{tpu_custom_call.1} parent=1 // loop_footer
      %s20 = sadd.s32 1, %s16
    $region7: #{tpu_custom_call.1} parent=1 // loop_footer_branch
      %15 = sbr.rel target = $region3
    $region8: #{tpu_custom_call.1} parent=1 // loop_exit
      _
    %320 = vsyncpa [#allocation3], 1
    %s321 = scalar_lea.sflag [#allocation3], 1
    %322 = vsyncpa %s321, 1
    %323 = vsyncpa [#allocation6], 1
    %324 = vsyncpa [#allocation4], 1
    %s325 = scalar_lea.sflag [#allocation4], 1
    %326 = vsyncpa %s325, 1

</llo_original>
